<compile_context>
chip_gen: v7x
topology: tpu7x:2x2x1
jax: 0.10.0
libtpu: 0.0.40
codegen_flags: <defaults>
</compile_context>

<pallas_src>
import math

import jax
import jax.numpy as jnp
from jax.experimental import pallas as pl
from jax.experimental.pallas import tpu as pltpu


def _round_up(x, m):
    return ((x + m - 1) // m) * m


def _pick_block_rows(batch, emb_dim):
    # Keep (6 inputs + 2 outputs) * 2 pipeline buffers of a (TB, D) f32 tile
    # within ~8 MiB so we never hit the scoped VMEM cliff on any generation.
    budget = 8 << 20
    per_row = 2 * (6 * emb_dim + 2) * 4  # double-buffered, f32
    tb = budget // per_row
    tb = max(8, min(int(tb), 4096))
    tb = (tb // 8) * 8                    # sublane multiple
    return min(tb, _round_up(batch, 8))


def _complex_kernel(h_re_ref, h_im_ref, t_re_ref, t_im_ref, r_re_ref, r_im_ref,
                    score_ref, regul_ref):
    h_re = h_re_ref[...]
    h_im = h_im_ref[...]
    t_re = t_re_ref[...]
    t_im = t_im_ref[...]
    r_re = r_re_ref[...]
    r_im = r_im_ref[...]

    # Factored ComplEx score (6 muls / element instead of 8):
    # score = -sum_d( r_re*(h_re*t_re + h_im*t_im) + r_im*(h_re*t_im - h_im*t_re) )
    re_part = h_re * t_re + h_im * t_im
    im_part = h_re * t_im - h_im * t_re
    prod = r_re * re_part + r_im * im_part
    score_ref[...] = -jnp.sum(prod, axis=-1, keepdims=True)

    # Fused regularization partials: one reduction over a single summed-squares
    # term; per-row partial sums, finished (sum / (B*D)) in the wrapper.
    sq = (h_re * h_re + h_im * h_im
          + t_re * t_re + t_im * t_im
          + r_re * r_re + r_im * r_im)
    regul_ref[...] = jnp.sum(sq, axis=-1, keepdims=True)


def complex_forward(batch_input, ent_re, ent_im, rel_re, rel_im, *,
                    block_rows=None):
    """Pallas-backed ComplEx forward.

    batch_input: (B, 3) int32 with columns (head, relation, tail), matching the
    PyTorch module (h = col 0, r = col 1, t = col 2).
    Returns (score[B], regul[]) as float32.
    """
    batch_h = batch_input[:, 0]
    batch_r = batch_input[:, 1]
    batch_t = batch_input[:, 2]

    # Embedding lookups (JAX glue).
    h_re = jnp.take(ent_re, batch_h, axis=0)
    h_im = jnp.take(ent_im, batch_h, axis=0)
    t_re = jnp.take(ent_re, batch_t, axis=0)
    t_im = jnp.take(ent_im, batch_t, axis=0)
    r_re = jnp.take(rel_re, batch_r, axis=0)
    r_im = jnp.take(rel_im, batch_r, axis=0)

    B, D = h_re.shape
    if block_rows is None:
        tb = _pick_block_rows(B, D)
    else:
        tb = min(_round_up(int(block_rows), 8), _round_up(B, 8))
    b_pad = _round_up(B, tb)

    inputs = [h_re, h_im, t_re, t_im, r_re, r_im]
    if b_pad != B:
        pad = ((0, b_pad - B), (0, 0))
        inputs = [jnp.pad(x, pad) for x in inputs]

    grid = (b_pad // tb,)
    in_spec = pl.BlockSpec((tb, D), lambda i: (i, 0))
    out_spec = pl.BlockSpec((tb, 1), lambda i: (i, 0))

    cost = pl.CostEstimate(
        flops=int(24 * b_pad * D),
        transcendentals=0,
        bytes_accessed=int(6 * b_pad * D * 4 + 2 * b_pad * 4),
    )

    score2d, regul_rows = pl.pallas_call(
        _complex_kernel,
        out_shape=(jax.ShapeDtypeStruct((b_pad, 1), jnp.float32),
                   jax.ShapeDtypeStruct((b_pad, 1), jnp.float32)),
        grid=grid,
        in_specs=[in_spec] * 6,
        out_specs=(out_spec, out_spec),
        compiler_params=pltpu.CompilerParams(
            dimension_semantics=("parallel",)),
        cost_estimate=cost,
    )(*inputs)

    score = score2d[:B, 0]
    regul = jnp.sum(regul_rows[:B, 0]) / jnp.float32(B * D)
    return score, regul


def _xavier_uniform(key, shape):
    # nn.init.xavier_uniform_ for a (fan_out, fan_in) = (rows, cols) 2D tensor.
    fan_in, fan_out = shape[1], shape[0]
    a = math.sqrt(6.0 / (fan_in + fan_out))
    return jax.random.uniform(key, shape, dtype=jnp.float32, minval=-a, maxval=a)


def _reference_forward(batch_input, ent_re, ent_im, rel_re, rel_im):
    batch_h = batch_input[:, 0]
    batch_r = batch_input[:, 1]
    batch_t = batch_input[:, 2]
    h_re = ent_re[batch_h]
    h_im = ent_im[batch_h]
    t_re = ent_re[batch_t]
    t_im = ent_im[batch_t]
    r_re = rel_re[batch_r]
    r_im = rel_im[batch_r]
    score = -jnp.sum(h_re * t_re * r_re + h_im * t_im * r_re
                     + h_re * t_im * r_im - h_im * t_re * r_im, axis=-1)
    regul = (jnp.mean(h_re ** 2) + jnp.mean(h_im ** 2)
             + jnp.mean(t_re ** 2) + jnp.mean(t_im ** 2)
             + jnp.mean(r_re ** 2) + jnp.mean(r_im ** 2))
    return score, regul


if __name__ == "__main__":
    emb_dim = 32
    n_entity = 64
    n_relation = 16

    key = jax.random.PRNGKey(0)
    k_ent_re, k_ent_im, k_rel_re, k_rel_im, k_idx = jax.random.split(key, 5)

    ent_re = _xavier_uniform(k_ent_re, (n_entity, emb_dim))
    ent_im = _xavier_uniform(k_ent_im, (n_entity, emb_dim))
    rel_re = _xavier_uniform(k_rel_re, (n_relation, emb_dim))
    rel_im = _xavier_uniform(k_rel_im, (n_relation, emb_dim))

    # (batch, forced block_rows): small single-tile case, and a multi-tile case
    # that exercises the grid pipeline + batch padding path.
    for batch, block_rows in ((8, None), (200, 64)):
        k_h, k_r, k_t, k_idx = jax.random.split(k_idx, 4)
        batch_h = jax.random.randint(k_h, (batch,), 0, n_entity, dtype=jnp.int32)
        batch_r = jax.random.randint(k_r, (batch,), 0, n_relation, dtype=jnp.int32)
        batch_t = jax.random.randint(k_t, (batch,), 0, n_entity, dtype=jnp.int32)
        batch_input = jnp.stack([batch_h, batch_r, batch_t], axis=1)  # (B,3) [h,r,t]

        score, regul = complex_forward(batch_input, ent_re, ent_im,
                                       rel_re, rel_im, block_rows=block_rows)
        jax.block_until_ready((score, regul))

        score_ref, regul_ref = _reference_forward(batch_input, ent_re, ent_im,
                                                  rel_re, rel_im)
        assert score.shape == (batch,)
        assert jnp.allclose(score, score_ref, atol=1e-5, rtol=1e-5)
        assert jnp.allclose(regul, regul_ref, atol=1e-5, rtol=1e-5)

    print("KERNEL_OK")
</pallas_src>

<mosaic_0001>
module attributes {stable_mosaic.version = 11 : i64} {
  func.func @_complex_kernel(%arg0: i32, %arg1: memref<8x32xf32, #tpu.memory_space<vmem>>, %arg2: memref<8x32xf32, #tpu.memory_space<vmem>>, %arg3: memref<8x32xf32, #tpu.memory_space<vmem>>, %arg4: memref<8x32xf32, #tpu.memory_space<vmem>>, %arg5: memref<8x32xf32, #tpu.memory_space<vmem>>, %arg6: memref<8x32xf32, #tpu.memory_space<vmem>>, %arg7: memref<8x1xf32, #tpu.memory_space<vmem>>, %arg8: memref<8x1xf32, #tpu.memory_space<vmem>>) attributes {dimension_semantics = [#tpu.dimension_semantics<parallel>], iteration_bounds = array<i64: 1>, scalar_prefetch = 0 : i64, scratch_operands = 0 : i64, tpu.core_type = #tpu.core_type<tc>, window_params = [{transform_indices = @transform_0, window_bounds = array<i64: 8, 32>}, {transform_indices = @transform_1, window_bounds = array<i64: 8, 32>}, {transform_indices = @transform_2, window_bounds = array<i64: 8, 32>}, {transform_indices = @transform_3, window_bounds = array<i64: 8, 32>}, {transform_indices = @transform_4, window_bounds = array<i64: 8, 32>}, {transform_indices = @transform_5, window_bounds = array<i64: 8, 32>}, {transform_indices = @transform_6, window_bounds = array<i64: 8, 1>}, {transform_indices = @transform_7, window_bounds = array<i64: 8, 1>}]} {
    %c0 = arith.constant 0 : index
    %c0_0 = arith.constant 0 : index
    %0 = vector.load %arg1[%c0, %c0_0] : memref<8x32xf32, #tpu.memory_space<vmem>>, vector<8x32xf32>
    %c0_1 = arith.constant 0 : index
    %c0_2 = arith.constant 0 : index
    %1 = vector.load %arg2[%c0_1, %c0_2] : memref<8x32xf32, #tpu.memory_space<vmem>>, vector<8x32xf32>
    %c0_3 = arith.constant 0 : index
    %c0_4 = arith.constant 0 : index
    %2 = vector.load %arg3[%c0_3, %c0_4] : memref<8x32xf32, #tpu.memory_space<vmem>>, vector<8x32xf32>
    %c0_5 = arith.constant 0 : index
    %c0_6 = arith.constant 0 : index
    %3 = vector.load %arg4[%c0_5, %c0_6] : memref<8x32xf32, #tpu.memory_space<vmem>>, vector<8x32xf32>
    %c0_7 = arith.constant 0 : index
    %c0_8 = arith.constant 0 : index
    %4 = vector.load %arg5[%c0_7, %c0_8] : memref<8x32xf32, #tpu.memory_space<vmem>>, vector<8x32xf32>
    %c0_9 = arith.constant 0 : index
    %c0_10 = arith.constant 0 : index
    %5 = vector.load %arg6[%c0_9, %c0_10] : memref<8x32xf32, #tpu.memory_space<vmem>>, vector<8x32xf32>
    %6 = arith.mulf %0, %2 : vector<8x32xf32>
    %7 = arith.mulf %1, %3 : vector<8x32xf32>
    %8 = arith.addf %6, %7 : vector<8x32xf32>
    %9 = arith.mulf %0, %3 : vector<8x32xf32>
    %10 = arith.mulf %1, %2 : vector<8x32xf32>
    %11 = arith.subf %9, %10 : vector<8x32xf32>
    %12 = arith.mulf %4, %8 : vector<8x32xf32>
    %13 = arith.mulf %5, %11 : vector<8x32xf32>
    %14 = arith.addf %12, %13 : vector<8x32xf32>
    %cst = arith.constant dense<0.000000e+00> : vector<8xf32>
    %15 = vector.multi_reduction <add>, %14, %cst [1] : vector<8x32xf32> to vector<8xf32>
    %16 = vector.shape_cast %15 : vector<8xf32> to vector<8x1xf32>
    %cst_11 = arith.constant 0.000000e+00 : f32
    %17 = vector.broadcast %cst_11 : f32 to vector<8x1xf32>
    %18 = arith.subf %17, %16 : vector<8x1xf32>
    %c0_12 = arith.constant 0 : index
    %c0_13 = arith.constant 0 : index
    %19 = vector.load %arg7[%c0_12, %c0_13] : memref<8x1xf32, #tpu.memory_space<vmem>>, vector<8x1xf32>
    tpu.vector_store %arg7[%c0_12, %c0_13], %18 {strides = array<i32>} : memref<8x1xf32, #tpu.memory_space<vmem>>, vector<8x1xf32>,
    %20 = arith.mulf %0, %0 : vector<8x32xf32>
    %21 = arith.mulf %1, %1 : vector<8x32xf32>
    %22 = arith.addf %20, %21 : vector<8x32xf32>
    %23 = arith.mulf %2, %2 : vector<8x32xf32>
    %24 = arith.addf %22, %23 : vector<8x32xf32>
    %25 = arith.mulf %3, %3 : vector<8x32xf32>
    %26 = arith.addf %24, %25 : vector<8x32xf32>
    %27 = arith.mulf %4, %4 : vector<8x32xf32>
    %28 = arith.addf %26, %27 : vector<8x32xf32>
    %29 = arith.mulf %5, %5 : vector<8x32xf32>
    %30 = arith.addf %28, %29 : vector<8x32xf32>
    %cst_14 = arith.constant dense<0.000000e+00> : vector<8xf32>
    %31 = vector.multi_reduction <add>, %30, %cst_14 [1] : vector<8x32xf32> to vector<8xf32>
    %32 = vector.shape_cast %31 : vector<8xf32> to vector<8x1xf32>
    %c0_15 = arith.constant 0 : index
    %c0_16 = arith.constant 0 : index
    %33 = vector.load %arg8[%c0_15, %c0_16] : memref<8x1xf32, #tpu.memory_space<vmem>>, vector<8x1xf32>
    tpu.vector_store %arg8[%c0_15, %c0_16], %32 {strides = array<i32>} : memref<8x1xf32, #tpu.memory_space<vmem>>, vector<8x1xf32>,
    return
  }
  func.func @transform_0(%arg0: i32) -> (i32, i32) {
    %c0_i32 = arith.constant 0 : i32
    %c0_i32_0 = arith.constant 0 : i32
    return %arg0, %c0_i32 : i32, i32
  }
  func.func @transform_1(%arg0: i32) -> (i32, i32) {
    %c0_i32 = arith.constant 0 : i32
    %c0_i32_0 = arith.constant 0 : i32
    return %arg0, %c0_i32 : i32, i32
  }
  func.func @transform_2(%arg0: i32) -> (i32, i32) {
    %c0_i32 = arith.constant 0 : i32
    %c0_i32_0 = arith.constant 0 : i32
    return %arg0, %c0_i32 : i32, i32
  }
  func.func @transform_3(%arg0: i32) -> (i32, i32) {
    %c0_i32 = arith.constant 0 : i32
    %c0_i32_0 = arith.constant 0 : i32
    return %arg0, %c0_i32 : i32, i32
  }
  func.func @transform_4(%arg0: i32) -> (i32, i32) {
    %c0_i32 = arith.constant 0 : i32
    %c0_i32_0 = arith.constant 0 : i32
    return %arg0, %c0_i32 : i32, i32
  }
  func.func @transform_5(%arg0: i32) -> (i32, i32) {
    %c0_i32 = arith.constant 0 : i32
    %c0_i32_0 = arith.constant 0 : i32
    return %arg0, %c0_i32 : i32, i32
  }
  func.func @transform_6(%arg0: i32) -> (i32, i32) {
    %c0_i32 = arith.constant 0 : i32
    %c0_i32_0 = arith.constant 0 : i32
    return %arg0, %c0_i32 : i32, i32
  }
  func.func @transform_7(%arg0: i32) -> (i32, i32) {
    %c0_i32 = arith.constant 0 : i32
    %c0_i32_0 = arith.constant 0 : i32
    return %arg0, %c0_i32 : i32, i32
  }
}

</mosaic_0001>

<llo_original>
// kernel: tpu_custom_call.1
$region0: #{tpu_custom_call.1}
  #allocation0 [shape = 'u32[]', space=smem, size = 0x4, offset = 0x4, fixed_abs, tag = 'smem constant byte address 0x4 - core index']
  #allocation1 [shape = 'u32[144,128]{1,0:T(1,128)}', space=vmem, size = 0x12000, scoped, tag = 'internal scratch']
  %s0 = inlined_call_operand.hbm [shape: f32[8,32], index: 0, kind: input, shape index: {}]
  %s1 = inlined_call_operand.hbm [shape: f32[8,32], index: 1, kind: input, shape index: {}]
  %s2 = inlined_call_operand.hbm [shape: f32[8,32], index: 2, kind: input, shape index: {}]
  %s3 = inlined_call_operand.vmem [shape: f32[8,32], index: 3, kind: input, shape index: {}]
  %s4 = inlined_call_operand.hbm [shape: f32[8,32], index: 4, kind: input, shape index: {}]
  %s5 = inlined_call_operand.vmem [shape: f32[8,32], index: 5, kind: input, shape index: {}]
  %s6 = inlined_call_operand.vmem [shape: f32[8,1], index: 6, kind: output, shape index: {0}]
  %s7 = inlined_call_operand.vmem [shape: f32[8,1], index: 7, kind: output, shape index: {1}]
  %8 = xla_tuple %s6, %s7
  %s9 = sld [smem:[#allocation0]]
  $region58: #{tpu_custom_call.1} parent=0
    _
  %s11 = ssub.s32 1, %s9
  %s12 = scalar_select 0, %s11, %s9
  $region1: #{tpu_custom_call.1} parent=0
    #allocation2 [shape = 'u8[4096]{0}', space=vmem, size = 0x1000, scoped, tag = 'input window, operand 0, single buffered']
    #allocation3 [shape = 's32[1]{0}', space=sflag, size = 0x4, scoped, tag = 'scoped memory for tpu_custom_call.1']
    #allocation4 [shape = 'u8[4096]{0}', space=vmem, size = 0x1000, scoped, tag = 'input window, operand 1, single buffered']
    #allocation5 [shape = 's32[1]{0}', space=sflag, size = 0x4, scoped, tag = 'scoped memory for tpu_custom_call.1']
    #allocation6 [shape = 'u8[4096]{0}', space=vmem, size = 0x1000, scoped, tag = 'input window, operand 2, single buffered']
    #allocation7 [shape = 'u8[4096]{0}', space=vmem, size = 0x1000, scoped, tag = 'input window, operand 4, single buffered']
    #allocation8 [shape = 's32[1]{0}', space=sflag, size = 0x4, scoped, tag = 'scoped memory for tpu_custom_call.1']
    %13 = vsyncpa [#allocation3], 0
    %14 = vsyncpa [#allocation5], 0
    %15 = vsyncpa [#allocation8], 0
    // Predicated region
    $region2: #{tpu_custom_call.1} parent=1 // pred_check
      _
    $region3: #{tpu_custom_call.1} parent=1 // pred_check_branch
      %17 = sbr.rel (0) target = $region5
    $region4: #{tpu_custom_call.1} parent=1 // pred_region
      %s19 = ssub.s32 128, 128
      %20 = vsyncadd [#allocation3], %s19
      %s22 = sshll.u32 [#allocation2], 4
      %s23 = int_to_ptr.vmem [resolvable:$true] %s22
      %25 = dma.hbm_to_vmem [thread:$0]  %s0, 128, %s23, [#allocation3]
    $region5: #{tpu_custom_call.1} parent=1 // pred_fallthru
      _
    // Predicated region
    $region6: #{tpu_custom_call.1} parent=1 // pred_check
      _
    $region7: #{tpu_custom_call.1} parent=1 // pred_check_branch
      %27 = sbr.rel (0) target = $region9
    $region8: #{tpu_custom_call.1} parent=1 // pred_region
      %s29 = ssub.s32 128, 128
      %30 = vsyncadd [#allocation5], %s29
      %s32 = sshll.u32 [#allocation4], 4
      %s33 = int_to_ptr.vmem [resolvable:$true] %s32
      %35 = dma.hbm_to_vmem [thread:$0]  %s1, 128, %s33, [#allocation5]
    $region9: #{tpu_custom_call.1} parent=1 // pred_fallthru
      _
    // Predicated region
    $region10: #{tpu_custom_call.1} parent=1 // pred_check
      _
    $region11: #{tpu_custom_call.1} parent=1 // pred_check_branch
      %37 = sbr.rel (0) target = $region13
    $region12: #{tpu_custom_call.1} parent=1 // pred_region
      %s39 = ssub.s32 128, 128
      %40 = vsyncadd [#allocation5], %s39
      %s42 = sshll.u32 [#allocation6], 4
      %s43 = int_to_ptr.vmem [resolvable:$true] %s42
      %45 = dma.hbm_to_vmem [thread:$0]  %s2, 128, %s43, [#allocation5]
    $region13: #{tpu_custom_call.1} parent=1 // pred_fallthru
      _
    // Predicated region
    $region14: #{tpu_custom_call.1} parent=1 // pred_check
      _
    $region15: #{tpu_custom_call.1} parent=1 // pred_check_branch
      %47 = sbr.rel (0) target = $region17
    $region16: #{tpu_custom_call.1} parent=1 // pred_region
      _
    $region17: #{tpu_custom_call.1} parent=1 // pred_fallthru
      _
    // Predicated region
    $region18: #{tpu_custom_call.1} parent=1 // pred_check
      _
    $region19: #{tpu_custom_call.1} parent=1 // pred_check_branch
      %49 = sbr.rel (0) target = $region21
    $region20: #{tpu_custom_call.1} parent=1 // pred_region
      %s51 = ssub.s32 128, 128
      %52 = vsyncadd [#allocation8], %s51
      %s54 = sshll.u32 [#allocation7], 4
      %s55 = int_to_ptr.vmem [resolvable:$true] %s54
      %57 = dma.hbm_to_vmem [thread:$0]  %s4, 128, %s55, [#allocation8]
    $region21: #{tpu_custom_call.1} parent=1 // pred_fallthru
      _
    // Predicated region
    $region22: #{tpu_custom_call.1} parent=1 // pred_check
      _
    $region23: #{tpu_custom_call.1} parent=1 // pred_check_branch
      %59 = sbr.rel (0) target = $region25
    $region24: #{tpu_custom_call.1} parent=1 // pred_region
      _
    $region25: #{tpu_custom_call.1} parent=1 // pred_fallthru
      _
    // Predicated region
    $region26: #{tpu_custom_call.1} parent=1 // pred_check
      _
    $region27: #{tpu_custom_call.1} parent=1 // pred_check_branch
      %61 = sbr.rel (0) target = $region29
    $region28: #{tpu_custom_call.1} parent=1 // pred_region
      %62 = dma.done [#allocation3], 128
    $region29: #{tpu_custom_call.1} parent=1 // pred_fallthru
      _
    // Predicated region
    $region30: #{tpu_custom_call.1} parent=1 // pred_check
      _
    $region31: #{tpu_custom_call.1} parent=1 // pred_check_branch
      %64 = sbr.rel (0) target = $region33
    $region32: #{tpu_custom_call.1} parent=1 // pred_region
      %65 = dma.done [#allocation5], 128
    $region33: #{tpu_custom_call.1} parent=1 // pred_fallthru
      _
    // Predicated region
    $region34: #{tpu_custom_call.1} parent=1 // pred_check
      _
    $region35: #{tpu_custom_call.1} parent=1 // pred_check_branch
      %67 = sbr.rel (0) target = $region37
    $region36: #{tpu_custom_call.1} parent=1 // pred_region
      %68 = dma.done [#allocation5], 128
    $region37: #{tpu_custom_call.1} parent=1 // pred_fallthru
      _
    // Predicated region
    $region38: #{tpu_custom_call.1} parent=1 // pred_check
      _
    $region39: #{tpu_custom_call.1} parent=1 // pred_check_branch
      %70 = sbr.rel (0) target = $region41
    $region40: #{tpu_custom_call.1} parent=1 // pred_region
      %71 = dma.done [#allocation8], 128
    $region41: #{tpu_custom_call.1} parent=1 // pred_fallthru
      _
    %v72 = vld [vmem:[#allocation2] sm:$0xff]
    %v73 = vld [vmem:[#allocation4] sm:$0xff]
    %v74 = vld [vmem:[#allocation6] sm:$0xff]
    %v75 = vld [vmem:[%s3] sm:$0xff]
    %v76 = vld [vmem:[#allocation7] sm:$0xff]
    %v77 = vld [vmem:[%s5] sm:$0xff]
    %v78 = vmul.f32 %v72, %v74
    %v79 = vmul.f32 %v73, %v75
    %v80 = vadd.f32 %v78, %v79
    %v81 = vmul.f32 %v72, %v75
    %v82 = vmul.f32 %v73, %v74
    %v83 = vsub.f32 %v81, %v82
    %v84 = vmul.f32 %v76, %v80
    %v85 = vmul.f32 %v77, %v83
    %v86 = vadd.f32 %v84, %v85
    %vm87 = vcmask 261120
    %v88 = vsel %vm87, %v86, 0.0
    %89 = vadd.xlane.f32.xlu0 %v88
    %v90 = vpop.xlane.xlu0 %89
    %v91 = vsub.f32 0.0, %v90
    %vm92 = vcmask 7168
    %93 = vst.msk [vmem:[%s6] sm:$0xff] %vm92, %v91
    %v94 = vmul.f32 %v72, %v72
    %v95 = vmul.f32 %v73, %v73
    %v96 = vadd.f32 %v94, %v95
    %v97 = vmul.f32 %v74, %v74
    %v98 = vadd.f32 %v96, %v97
    %v99 = vmul.f32 %v75, %v75
    %v100 = vadd.f32 %v98, %v99
    %v101 = vmul.f32 %v76, %v76
    %v102 = vadd.f32 %v100, %v101
    %v103 = vmul.f32 %v77, %v77
    %v104 = vadd.f32 %v102, %v103
    %v105 = vsel %vm87, %v104, 0.0
    %106 = vadd.xlane.f32.xlu0 %v105
    %v107 = vpop.xlane.xlu0 %106
    %108 = vst.msk [vmem:[%s7] sm:$0xff] %vm92, %v107
    // Predicated region
    $region42: #{tpu_custom_call.1} parent=1 // pred_check
      _
    $region43: #{tpu_custom_call.1} parent=1 // pred_check_branch
      %110 = sbr.rel (0) target = $region45
    $region44: #{tpu_custom_call.1} parent=1 // pred_region
      _
    $region45: #{tpu_custom_call.1} parent=1 // pred_fallthru
      _
    // Predicated region
    $region46: #{tpu_custom_call.1} parent=1 // pred_check
      _
    $region47: #{tpu_custom_call.1} parent=1 // pred_check_branch
      %112 = sbr.rel (0) target = $region49
    $region48: #{tpu_custom_call.1} parent=1 // pred_region
      _
    $region49: #{tpu_custom_call.1} parent=1 // pred_fallthru
      _
    // Predicated region
    $region50: #{tpu_custom_call.1} parent=1 // pred_check
      _
    $region51: #{tpu_custom_call.1} parent=1 // pred_check_branch
      %114 = sbr.rel (0) target = $region53
    $region52: #{tpu_custom_call.1} parent=1 // pred_region
      _
    $region53: #{tpu_custom_call.1} parent=1 // pred_fallthru
      _
    // Predicated region
    $region54: #{tpu_custom_call.1} parent=1 // pred_check
      _
    $region55: #{tpu_custom_call.1} parent=1 // pred_check_branch
      %116 = sbr.rel (0) target = $region57
    $region56: #{tpu_custom_call.1} parent=1 // pred_region
      _
    $region57: #{tpu_custom_call.1} parent=1 // pred_fallthru
      _
    %117 = vsyncpa [#allocation3], 1
    %118 = vsyncpa [#allocation5], 1
    %119 = vsyncpa [#allocation8], 1

</llo_original>
